<compile_context>
chip_gen: v5e
topology: v5e:2x2
jax: 0.10.0
libtpu: 0.0.40
codegen_flags: <defaults>
</compile_context>

<pallas_src>
import functools
import math

import jax
import jax.numpy as jnp
from jax.experimental import pallas as pl
from jax.experimental.pallas import tpu as pltpu


def _layernorm_kernel(x_ref, a_ref, b_ref, o_ref, *, eps, feat):
    # x_ref: (block_rows, feat); a_ref / b_ref: (1, feat)
    x = x_ref[...].astype(jnp.float32)

    # One-pass statistics: both reductions issue off the same sweep over x.
    s1 = jnp.sum(x, axis=-1, keepdims=True)
    s2 = jnp.sum(x * x, axis=-1, keepdims=True)
    mean = s1 * jnp.float32(1.0 / feat)
    # Unbiased variance (ddof=1), matching torch.Tensor.std() default.
    var = (s2 - s1 * mean) * jnp.float32(1.0 / (feat - 1))
    var = jnp.maximum(var, jnp.float32(0.0))
    std = jnp.sqrt(var)

    # eps added to std (not var), per the PyTorch module. EUP approx
    # reciprocal turns the broadcast divide into a broadcast multiply.
    inv = pl.reciprocal(std + jnp.float32(eps), approx=True)

    a = a_ref[...].astype(jnp.float32)
    b = b_ref[...].astype(jnp.float32)
    y = (x - mean) * inv * a + b
    o_ref[...] = y.astype(o_ref.dtype)


def _choose_block_rows(rows, feat, dtype_bytes, target_tile_bytes=4 << 20):
    """Pick a row tile that is ~target_tile_bytes, a multiple of 8, and
    leaves >= 2 grid steps when the row count allows (megacore sharding)."""
    row_bytes = max(1, feat * dtype_bytes)
    br = target_tile_bytes // row_bytes
    br = max(8, (br // 8) * 8)
    rows8 = ((rows + 7) // 8) * 8          # rows rounded up to a multiple of 8
    br = min(br, rows8)
    if br >= rows8 and rows8 >= 16:
        # Whole array fits one tile: split in two so the grid axis can be
        # sharded across v7x's two TensorCores and DMA/compute can pipeline.
        br = max(8, ((rows8 // 2) // 8) * 8)
    return br


def layer_norm(x, a, b, eps=1e-6):
    """LayerNorm over the last axis of x with learnable scale `a`, bias `b`.

    x: (..., features); a, b: (features,).  features must be >= 2 (unbiased std).
    """
    orig_shape = x.shape
    feat = orig_shape[-1]
    assert feat >= 2, "unbiased std (ddof=1) requires features >= 2"

    rows = 1
    for d in orig_shape[:-1]:
        rows *= int(d)

    x2 = x.reshape(rows, feat)
    a2 = a.reshape(1, feat)
    b2 = b.reshape(1, feat)

    dtype_bytes = jnp.dtype(x.dtype).itemsize
    block_rows = _choose_block_rows(rows, feat, dtype_bytes)

    # Pad ragged row counts up to a multiple of the tile (rows are
    # independent, so padding is safe); slice the result afterwards.
    rows_padded = ((rows + block_rows - 1) // block_rows) * block_rows
    if rows_padded != rows:
        x2 = jnp.pad(x2, ((0, rows_padded - rows), (0, 0)))

    grid = (rows_padded // block_rows,)

    kernel = functools.partial(_layernorm_kernel, eps=eps, feat=feat)

    cost = pl.CostEstimate(
        flops=8 * rows_padded * feat,
        transcendentals=2 * rows_padded,           # sqrt + reciprocal per row
        bytes_accessed=2 * rows_padded * feat * dtype_bytes
        + 2 * feat * dtype_bytes,
    )

    out = pl.pallas_call(
        kernel,
        out_shape=jax.ShapeDtypeStruct((rows_padded, feat), x.dtype),
        grid_spec=pltpu.PrefetchScalarGridSpec(
            num_scalar_prefetch=0,
            grid=grid,
            in_specs=[
                pl.BlockSpec((block_rows, feat), lambda i: (i, 0)),
                pl.BlockSpec((1, feat), lambda i: (0, 0)),   # gamma: constant tile
                pl.BlockSpec((1, feat), lambda i: (0, 0)),   # beta:  constant tile
            ],
            out_specs=pl.BlockSpec((block_rows, feat), lambda i: (i, 0)),
        ),
        compiler_params=pltpu.CompilerParams(
            dimension_semantics=("parallel",),
            vmem_limit_bytes=48 * 1024 * 1024,     # safe on v7x (64 MiB phys),
                                                   # lifts v5e/v6e scoped default
        ),
        cost_estimate=cost,
    )(x2, a2, b2)

    if rows_padded != rows:
        out = out[:rows]
    return out.reshape(orig_shape)


if __name__ == "__main__":
    key = jax.random.PRNGKey(0)
    batch, seq, features = 2, 8, 32

    # Deterministic parameter init, same as the PyTorch module:
    # a = ones(features), b = zeros(features)
    a = jnp.ones((features,), dtype=jnp.float32)
    b = jnp.zeros((features,), dtype=jnp.float32)

    x = jax.random.normal(key, (batch, seq, features), dtype=jnp.float32)

    y = layer_norm(x, a, b, eps=1e-6)
    y = jax.block_until_ready(y)

    # Reference in plain JAX (unbiased std, eps added to std — same as the
    # PyTorch module).  Tolerance accounts for the approx EUP reciprocal.
    mean = jnp.mean(x, axis=-1, keepdims=True)
    std = jnp.sqrt(
        jnp.sum((x - mean) ** 2, axis=-1, keepdims=True) / (features - 1)
    )
    ref = a * (x - mean) / (std + 1e-6) + b
    assert jnp.max(jnp.abs(y - ref)) < 1e-2, jnp.max(jnp.abs(y - ref))

    print("KERNEL_OK")
</pallas_src>

<mosaic_0001>
module attributes {stable_mosaic.version = 11 : i64} {
  func.func @_layernorm_kernel(%arg0: i32, %arg1: memref<8x32xf32, #tpu.memory_space<vmem>>, %arg2: memref<1x32xf32, #tpu.memory_space<vmem>>, %arg3: memref<1x32xf32, #tpu.memory_space<vmem>>, %arg4: memref<8x32xf32, #tpu.memory_space<vmem>>) attributes {dimension_semantics = [#tpu.dimension_semantics<parallel>], iteration_bounds = array<i64: 2>, scalar_prefetch = 0 : i64, scratch_operands = 0 : i64, tpu.core_type = #tpu.core_type<tc>, window_params = [{transform_indices = @transform_0, window_bounds = array<i64: 8, 32>}, {pipeline_mode = #tpu.pipeline_mode<synchronous>, transform_indices = @transform_1, window_bounds = array<i64: 1, 32>}, {pipeline_mode = #tpu.pipeline_mode<synchronous>, transform_indices = @transform_2, window_bounds = array<i64: 1, 32>}, {transform_indices = @transform_3, window_bounds = array<i64: 8, 32>}]} {
    %c0 = arith.constant 0 : index
    %c0_0 = arith.constant 0 : index
    %0 = vector.load %arg1[%c0, %c0_0] : memref<8x32xf32, #tpu.memory_space<vmem>>, vector<8x32xf32>
    %cst = arith.constant dense<0.000000e+00> : vector<8xf32>
    %1 = vector.multi_reduction <add>, %0, %cst [1] : vector<8x32xf32> to vector<8xf32>
    %2 = vector.shape_cast %1 : vector<8xf32> to vector<8x1xf32>
    %3 = arith.mulf %0, %0 : vector<8x32xf32>
    %cst_1 = arith.constant dense<0.000000e+00> : vector<8xf32>
    %4 = vector.multi_reduction <add>, %3, %cst_1 [1] : vector<8x32xf32> to vector<8xf32>
    %5 = vector.shape_cast %4 : vector<8xf32> to vector<8x1xf32>
    %cst_2 = arith.constant 3.125000e-02 : f32
    %6 = vector.broadcast %cst_2 : f32 to vector<8x1xf32>
    %7 = arith.mulf %2, %6 : vector<8x1xf32>
    %8 = arith.mulf %2, %7 : vector<8x1xf32>
    %9 = arith.subf %5, %8 : vector<8x1xf32>
    %cst_3 = arith.constant 0.0322580636 : f32
    %10 = vector.broadcast %cst_3 : f32 to vector<8x1xf32>
    %11 = arith.mulf %9, %10 : vector<8x1xf32>
    %cst_4 = arith.constant 0.000000e+00 : f32
    %12 = vector.broadcast %cst_4 : f32 to vector<8x1xf32>
    %13 = arith.maximumf %11, %12 : vector<8x1xf32>
    %14 = math.sqrt %13 : vector<8x1xf32>
    %cst_5 = arith.constant 9.99999997E-7 : f32
    %15 = vector.broadcast %cst_5 : f32 to vector<8x1xf32>
    %16 = arith.addf %14, %15 : vector<8x1xf32>
    %17 = tpu.reciprocal %16 {approx = true} : vector<8x1xf32> -> vector<8x1xf32>
    %c0_6 = arith.constant 0 : index
    %c0_7 = arith.constant 0 : index
    %18 = vector.load %arg2[%c0_6, %c0_7] : memref<1x32xf32, #tpu.memory_space<vmem>>, vector<1x32xf32>
    %c0_8 = arith.constant 0 : index
    %c0_9 = arith.constant 0 : index
    %19 = vector.load %arg3[%c0_8, %c0_9] : memref<1x32xf32, #tpu.memory_space<vmem>>, vector<1x32xf32>
    %20 = vector.broadcast %7 : vector<8x1xf32> to vector<8x32xf32>
    %21 = arith.subf %0, %20 : vector<8x32xf32>
    %22 = vector.broadcast %17 : vector<8x1xf32> to vector<8x32xf32>
    %23 = arith.mulf %21, %22 : vector<8x32xf32>
    %24 = vector.broadcast %18 : vector<1x32xf32> to vector<8x32xf32>
    %25 = arith.mulf %23, %24 : vector<8x32xf32>
    %26 = vector.broadcast %19 : vector<1x32xf32> to vector<8x32xf32>
    %27 = arith.addf %25, %26 : vector<8x32xf32>
    %c0_10 = arith.constant 0 : index
    %c0_11 = arith.constant 0 : index
    %28 = vector.load %arg4[%c0_10, %c0_11] : memref<8x32xf32, #tpu.memory_space<vmem>>, vector<8x32xf32>
    tpu.vector_store %arg4[%c0_10, %c0_11], %27 {strides = array<i32>} : memref<8x32xf32, #tpu.memory_space<vmem>>, vector<8x32xf32>,
    return
  }
  func.func @transform_0(%arg0: i32) -> (i32, i32) {
    %c0_i32 = arith.constant 0 : i32
    %c0_i32_0 = arith.constant 0 : i32
    return %arg0, %c0_i32 : i32, i32
  }
  func.func @transform_1(%arg0: i32) -> (i32, i32) {
    %c0_i32 = arith.constant 0 : i32
    %c0_i32_0 = arith.constant 0 : i32
    %c0_i32_1 = arith.constant 0 : i32
    return %c0_i32, %c0_i32_0 : i32, i32
  }
  func.func @transform_2(%arg0: i32) -> (i32, i32) {
    %c0_i32 = arith.constant 0 : i32
    %c0_i32_0 = arith.constant 0 : i32
    %c0_i32_1 = arith.constant 0 : i32
    return %c0_i32, %c0_i32_0 : i32, i32
  }
  func.func @transform_3(%arg0: i32) -> (i32, i32) {
    %c0_i32 = arith.constant 0 : i32
    %c0_i32_0 = arith.constant 0 : i32
    return %arg0, %c0_i32 : i32, i32
  }
}

</mosaic_0001>

<llo_original>
// kernel: tpu_custom_call.1
$region0: #{tpu_custom_call.1}
  #allocation0 [shape = 'u32[]', space=smem, size = 0x4, offset = 0x4, fixed_abs, tag = 'smem constant byte address 0x4 - core index']
  #allocation1 [shape = 'u32[72,128]{1,0:T(1,128)}', space=vmem, size = 0x9000, scoped, tag = 'internal scratch']
  %s0 = inlined_call_operand.hbm [shape: f32[16,32], index: 0, kind: input, shape index: {}]
  %s1 = inlined_call_operand.hbm [shape: f32[1,32], index: 1, kind: input, shape index: {}]
  %s2 = inlined_call_operand.vmem [shape: f32[1,32], index: 2, kind: input, shape index: {}]
  %s3 = inlined_call_operand.hbm [shape: f32[16,32], index: 3, kind: output, shape index: {}]
  %s4 = sld [smem:[#allocation0]]
  $region53: #{tpu_custom_call.1} parent=0
    _
  %s6 = ssub.s32 1, %s4
  %s7 = scalar_select 0, %s6, %s4
  $region1: #{tpu_custom_call.1} parent=0
    #allocation2 [shape = 'u8[8192]{0}', space=vmem, size = 0x2000, scoped, tag = 'input window, operand 0']
    #allocation3 [shape = 's32[2]{0}', space=sflag, size = 0x8, scoped, tag = 'scoped memory for tpu_custom_call.1']
    #allocation4 [shape = 's32[2]{0}', space=sflag, size = 0x8, scoped, tag = 'scoped memory for tpu_custom_call.1']
    #allocation5 [shape = 'u8[512]{0}', space=vmem, size = 0x400, scoped, tag = 'input window, operand 1, single buffered']
    #allocation6 [shape = 's32[1]{0}', space=sflag, size = 0x4, scoped, tag = 'scoped memory for tpu_custom_call.1']
    #allocation7 [shape = 'u8[8192]{0}', space=vmem, size = 0x2000, scoped, tag = 'output window, operand 0']
    %8 = vsyncpa [#allocation3], 0
    %s9 = scalar_lea.sflag [#allocation3], 1
    %10 = vsyncpa %s9, 0
    %11 = vsyncpa [#allocation6], 0
    %12 = vsyncpa [#allocation4], 0
    %s13 = scalar_lea.sflag [#allocation4], 1
    %14 = vsyncpa %s13, 0
    loop: start=0, step=1, limit=4
    $region2: #{tpu_custom_call.1} parent=1 // loop_pre_header
      _
    $region3: #{tpu_custom_call.1} parent=1 // loop_header
      %s16 = sphi 0, %s20
      %p17 = scmp.ge.s32.totalorder %s16, 4
      %s26 = sphi 0, %s28
      %s29 = sphi 0, %s26
      %s30 = sphi 0, %s29
      %s46 = sphi 0, %s30
      %s50 = sphi 0, %s50
      %s52 = sphi 0, %s50
      %s53 = sphi 0, %s52
      %s67 = sphi 0, %s53
      %s71 = sphi 0, %s71
      %s73 = sphi 0, %s71
      %s74 = sphi 0, %s73
      %s88 = sphi 0, %s74
      %s94 = sphi 0, %s96
      %s97 = sphi 0, %s94
      %s98 = sphi 0, %s97
      %s114 = sphi 0, %s98
    $region4: #{tpu_custom_call.1} parent=1 // loop_header_branch
      %19 = sbr.rel (%p17) target = $region8
    $region5: #{tpu_custom_call.1} parent=1 // loop_body
      %s21 = ssub.s32 %s16, 1
      %s22 = ssub.s32 %s16, 2
      %s23 = sadd.s32 %s16, 1
      %s24 = ssub.s32 %s16, %s23
      %p25 = scmp.eq.s32.totalorder %s24, 0
      %s27 = sadd.s32 %s26, 1
      %s28 = scalar_select %p25, %s26, %s27
      %p31 = pneg %p25
      %p32 = scmp.eq.s32.totalorder %s16, 1
      %p33 = por %p31, %p32
      %p34 = scmp.ne.s32.totalorder %s26, %s29
      %p35 = scmp.eq.s32.totalorder %s16, 0
      %p36 = por %p34, %p35
      %p37 = scmp.ne.s32.totalorder %s26, %s29
      %p38 = scmp.eq.s32.totalorder %s21, 1
      %p39 = por %p37, %p38
      %p40 = scmp.ne.s32.totalorder %s29, %s30
      %p41 = scmp.eq.s32.totalorder %s21, 0
      %p42 = por %p40, %p41
      %p43 = scmp.ne.s32.totalorder %s29, %s30
      %p44 = scmp.eq.s32.totalorder %s22, 1
      %p45 = por %p43, %p44
      %p47 = scmp.ne.s32.totalorder %s30, %s46
      %p48 = scmp.eq.s32.totalorder %s22, 0
      %p49 = por %p47, %p48
      %s51 = sadd.s32 %s50, 1
      %p54 = scmp.eq.s32.totalorder %s16, 1
      %p55 = scmp.ne.s32.totalorder %s50, %s52
      %p56 = scmp.eq.s32.totalorder %s16, 0
      %p57 = por %p55, %p56
      %p58 = scmp.ne.s32.totalorder %s50, %s52
      %p59 = scmp.eq.s32.totalorder %s21, 1
      %p60 = por %p58, %p59
      %p61 = scmp.ne.s32.totalorder %s52, %s53
      %p62 = scmp.eq.s32.totalorder %s21, 0
      %p63 = por %p61, %p62
      %p64 = scmp.ne.s32.totalorder %s52, %s53
      %p65 = scmp.eq.s32.totalorder %s22, 1
      %p66 = por %p64, %p65
      %p68 = scmp.ne.s32.totalorder %s53, %s67
      %p69 = scmp.eq.s32.totalorder %s22, 0
      %p70 = por %p68, %p69
      %s72 = sadd.s32 %s71, 1
      %p75 = scmp.eq.s32.totalorder %s16, 1
      %p76 = scmp.ne.s32.totalorder %s71, %s73
      %p77 = scmp.eq.s32.totalorder %s16, 0
      %p78 = por %p76, %p77
      %p79 = scmp.ne.s32.totalorder %s71, %s73
      %p80 = scmp.eq.s32.totalorder %s21, 1
      %p81 = por %p79, %p80
      %p82 = scmp.ne.s32.totalorder %s73, %s74
      %p83 = scmp.eq.s32.totalorder %s21, 0
      %p84 = por %p82, %p83
      %p85 = scmp.ne.s32.totalorder %s73, %s74
      %p86 = scmp.eq.s32.totalorder %s22, 1
      %p87 = por %p85, %p86
      %p89 = scmp.ne.s32.totalorder %s74, %s88
      %p90 = scmp.eq.s32.totalorder %s22, 0
      %p91 = por %p89, %p90
      %s92 = ssub.s32 %s16, %s23
      %p93 = scmp.eq.s32.totalorder %s92, 0
      %s95 = sadd.s32 %s94, 1
      %s96 = scalar_select %p93, %s94, %s95
      %p99 = pneg %p93
      %p100 = scmp.eq.s32.totalorder %s16, 1
      %p101 = por %p99, %p100
      %p102 = scmp.ne.s32.totalorder %s94, %s97
      %p103 = scmp.eq.s32.totalorder %s16, 0
      %p104 = por %p102, %p103
      %p105 = scmp.ne.s32.totalorder %s94, %s97
      %p106 = scmp.eq.s32.totalorder %s21, 1
      %p107 = por %p105, %p106
      %p108 = scmp.ne.s32.totalorder %s97, %s98
      %p109 = scmp.eq.s32.totalorder %s21, 0
      %p110 = por %p108, %p109
      %p111 = scmp.ne.s32.totalorder %s97, %s98
      %p112 = scmp.eq.s32.totalorder %s22, 1
      %p113 = por %p111, %p112
      %p115 = scmp.ne.s32.totalorder %s98, %s114
      %p116 = scmp.eq.s32.totalorder %s22, 0
      %p117 = por %p115, %p116
      %p118 = scmp.le.s32.totalorder 1, %s16
      %p119 = scmp.lt.s32.totalorder %s16, 3
      %p120 = pnand %p118, %p119
      %p121 = pneg %p120
      // Predicated region
      $region9: #{tpu_custom_call.1} parent=5 // pred_check
        _
      $region10: #{tpu_custom_call.1} parent=5 // pred_check_branch
        %123 = sbr.rel (%p120) target = $region12
      $region11: #{tpu_custom_call.1} parent=5 // pred_region
        %s124 = ssub.s32 %s16, 1
        // Predicated region
        $region13: #{tpu_custom_call.1} parent=11 // pred_check
          %p125 = pneg %p63
        $region14: #{tpu_custom_call.1} parent=11 // pred_check_branch
          %127 = sbr.rel (%p125) target = $region16
        $region15: #{tpu_custom_call.1} parent=11 // pred_region
          %129 = vsyncadd [#allocation6], 0
          %s131 = sshll.u32 %s1, 4
          %s132 = int_to_ptr.hbm [resolvable:$true] %s131
          %s133 = sshll.u32 [#allocation5], 4
          %s134 = int_to_ptr.vmem [resolvable:$true] %s133
          %136 = dma.hbm_to_vmem [thread:$0]  %s132, 16, %s134, [#allocation6]
        $region16: #{tpu_custom_call.1} parent=11 // pred_fallthru
          _
        // Predicated region
        $region17: #{tpu_custom_call.1} parent=11 // pred_check
          %p137 = pneg %p84
        $region18: #{tpu_custom_call.1} parent=11 // pred_check_branch
          %139 = sbr.rel (%p137) target = $region20
        $region19: #{tpu_custom_call.1} parent=11 // pred_region
          _
        $region20: #{tpu_custom_call.1} parent=11 // pred_fallthru
          _
      $region12: #{tpu_custom_call.1} parent=5 // pred_fallthru
        _
      %p140 = scmp.lt.s32.totalorder %s16, 2
      // Predicated region
      $region21: #{tpu_custom_call.1} parent=5 // pred_check
        %p141 = pneg %p140
      $region22: #{tpu_custom_call.1} parent=5 // pred_check_branch
        %143 = sbr.rel (%p141) target = $region24
      $region23: #{tpu_custom_call.1} parent=5 // pred_region
        // Predicated region
        $region25: #{tpu_custom_call.1} parent=23 // pred_check
          %p144 = pneg %p36
        $region26: #{tpu_custom_call.1} parent=23 // pred_check_branch
          %146 = sbr.rel (%p144) target = $region28
        $region27: #{tpu_custom_call.1} parent=23 // pred_region
          %s147 = sand.u32 %s26, 1
          %s148 = scalar_lea.sflag [#allocation3], %s147
          %s149 = sand.u32 %s26, 1
          %s150 = smul.addr %s149, 8
          %s151 = scalar_lea.vmem [#allocation2], %s150
          %153 = vsyncadd %s148, 0
          %s154 = smul.addr %s16, 8
          %s155 = scalar_lea.hbm %s0, %s154
          %s157 = sshll.u32 %s155, 4
          %s158 = int_to_ptr.hbm [resolvable:$true] %s157
          %s159 = sshll.u32 %s151, 4
          %s160 = int_to_ptr.vmem [resolvable:$true] %s159
          %162 = dma.hbm_to_vmem [thread:$0]  %s158, 128, %s160, %s148
        $region28: #{tpu_custom_call.1} parent=23 // pred_fallthru
          _
      $region24: #{tpu_custom_call.1} parent=5 // pred_fallthru
        _
      %p163 = scmp.le.s32.totalorder 1, %s16
      %p164 = scmp.lt.s32.totalorder %s16, 3
      %p165 = pnand %p163, %p164
      %p166 = pneg %p165
      // Predicated region
      $region29: #{tpu_custom_call.1} parent=5 // pred_check
        _
      $region30: #{tpu_custom_call.1} parent=5 // pred_check_branch
        %168 = sbr.rel (%p165) target = $region32
      $region31: #{tpu_custom_call.1} parent=5 // pred_region
        %s169 = ssub.s32 %s16, 1
        %s170 = sand.u32 %s29, 1
        %s171 = scalar_lea.sflag [#allocation3], %s170
        %s172 = sand.u32 %s29, 1
        %s173 = smul.addr %s172, 8
        %s174 = scalar_lea.vmem [#allocation2], %s173
        // Predicated region
        $region33: #{tpu_custom_call.1} parent=31 // pred_check
          %p175 = pneg %p42
        $region34: #{tpu_custom_call.1} parent=31 // pred_check_branch
          %177 = sbr.rel (%p175) target = $region36
        $region35: #{tpu_custom_call.1} parent=31 // pred_region
          %179 = dma.done %s171, 128
        $region36: #{tpu_custom_call.1} parent=31 // pred_fallthru
          _
        // Predicated region
        $region37: #{tpu_custom_call.1} parent=31 // pred_check
          %p180 = pneg %p63
        $region38: #{tpu_custom_call.1} parent=31 // pred_check_branch
          %182 = sbr.rel (%p180) target = $region40
        $region39: #{tpu_custom_call.1} parent=31 // pred_region
          %184 = dma.done [#allocation6], 16
        $region40: #{tpu_custom_call.1} parent=31 // pred_fallthru
          _
        %s185 = sand.u32 %s29, 1
        %s186 = scalar_lea.sflag [#allocation3], %s185
        %s187 = sand.u32 %s29, 1
        %s188 = smul.addr %s187, 8
        %s189 = scalar_lea.vmem [#allocation2], %s188
        %p190 = pneg %p42
        %p191 = pneg %p39
        %p192 = pneg %p63
        %p193 = pneg %p60
        %p194 = pneg %p84
        %p195 = pneg %p81
        %p196 = pneg %p110
        %p197 = pneg %p107
        %s198 = sand.u32 %s97, 1
        %s199 = scalar_lea.sflag [#allocation4], %s198
        %s200 = sand.u32 %s97, 1
        %s201 = smul.addr %s200, 8
        %s202 = scalar_lea.vmem [#allocation7], %s201
        %v203 = vld [vmem:[%s174] sm:$0xff]
        %vm204 = vcmask 261120
        %v205 = vsel %vm204, %v203, 0.0
        %206 = vadd.xlane.f32.xlu0 %v205
        %v207 = vpop.xlane.xlu0 %206
        %v208 = vmul.f32 %v203, %v203
        %v209 = vsel %vm204, %v208, 0.0
        %210 = vadd.xlane.f32.xlu0 %v209
        %v211 = vpop.xlane.xlu0 %210
        %v212 = vmul.f32 %v207, 0.03125
        %v213 = vmul.f32 %v207, %v212
        %v214 = vsub.f32 %v211, %v213
        %v215 = vmul.f32 %v214, 0.032258064
        %v216 = vmax.f32 %v215, 0.0
        %v217 = vrsqrt.pop %v216
        %v218 = vmul.f32 %v217, %v216
        %v219 = vmul.f32 %v218, %v217
        %v220 = vmul.f32 0.5, %v219
        %v221 = vsub.f32 1.5, %v220
        %v222 = vmul.f32 %v217, %v221
        %v223 = vmul.f32 %v216, %v222
        %vm224 = vcmp.eq.f32.partialorder %v216, inf
        %v225 = vsel %vm224, %v216, %v223
        %vm226 = vcmp.eq.f32.partialorder %v216, 0.0
        %v227 = vand.u32 %v216, 2147483648
        %v228 = vsel %vm226, %v227, %v225
        %v229 = vadd.f32 %v228, 1e-06
        %v230 = vrcp.pop %v229
        %v231 = vld [vmem:[#allocation5] sm:$0x1]
        %v232 = vld [vmem:[%s2] sm:$0x1]
        %v233 = vsub.f32 %v203, %v212
        %v234 = vmul.f32 %v233, %v230
        %v236 = vperm.slane %v231, 0
        %v238 = vmul.f32 %v234, %v236
        %v240 = vperm.slane %v232, 0
        %v242 = vadd.f32 %v238, %v240
        %243 = vst.msk [vmem:[%s202] sm:$0xff] %vm204, %v242
        %s244 = sand.u32 %s97, 1
        %s245 = scalar_lea.sflag [#allocation4], %s244
        %s246 = sand.u32 %s97, 1
        %s247 = smul.addr %s246, 8
        %s248 = scalar_lea.vmem [#allocation7], %s247
        // Predicated region
        $region41: #{tpu_custom_call.1} parent=31 // pred_check
          %p249 = pneg %p107
        $region42: #{tpu_custom_call.1} parent=31 // pred_check_branch
          %251 = sbr.rel (%p249) target = $region44
        $region43: #{tpu_custom_call.1} parent=31 // pred_region
          %253 = vsyncadd %s245, 0
          %s254 = smul.addr %s21, 8
          %s255 = scalar_lea.hbm %s3, %s254
          %s257 = sshll.u32 %s248, 4
          %s258 = int_to_ptr.vmem [resolvable:$true] %s257
          %s259 = sshll.u32 %s255, 4
          %s260 = int_to_ptr.hbm [resolvable:$true] %s259
          %262 = dma.vmem_to_hbm [thread:$0]  %s258, 128, %s260, %s245
        $region44: #{tpu_custom_call.1} parent=31 // pred_fallthru
          _
      $region32: #{tpu_custom_call.1} parent=5 // pred_fallthru
        _
      %p263 = scmp.le.s32.totalorder 2, %s16
      // Predicated region
      $region45: #{tpu_custom_call.1} parent=5 // pred_check
        %p264 = pneg %p263
      $region46: #{tpu_custom_call.1} parent=5 // pred_check_branch
        %266 = sbr.rel (%p264) target = $region48
      $region47: #{tpu_custom_call.1} parent=5 // pred_region
        %s267 = ssub.s32 %s16, 2
        // Predicated region
        $region49: #{tpu_custom_call.1} parent=47 // pred_check
          %p268 = pneg %p113
        $region50: #{tpu_custom_call.1} parent=47 // pred_check_branch
          %270 = sbr.rel (%p268) target = $region52
        $region51: #{tpu_custom_call.1} parent=47 // pred_region
          %s271 = sand.u32 %s98, 1
          %s272 = scalar_lea.sflag [#allocation4], %s271
          %s273 = sand.u32 %s98, 1
          %s274 = smul.addr %s273, 8
          %s275 = scalar_lea.vmem [#allocation7], %s274
          %277 = dma.done %s272, 128
        $region52: #{tpu_custom_call.1} parent=47 // pred_fallthru
          _
      $region48: #{tpu_custom_call.1} parent=5 // pred_fallthru
        _
    $region6: #{tpu_custom_call.1} parent=1 // loop_footer
      %s20 = sadd.s32 1, %s16
    $region7: #{tpu_custom_call.1} parent=1 // loop_footer_branch
      %15 = sbr.rel target = $region3
    $region8: #{tpu_custom_call.1} parent=1 // loop_exit
      _
    %278 = vsyncpa [#allocation3], 1
    %s279 = scalar_lea.sflag [#allocation3], 1
    %280 = vsyncpa %s279, 1
    %281 = vsyncpa [#allocation6], 1
    %282 = vsyncpa [#allocation4], 1
    %s283 = scalar_lea.sflag [#allocation4], 1
    %284 = vsyncpa %s283, 1

</llo_original>
